<compile_context>
chip_gen: v7x
topology: tpu7x:2x2x1
jax: 0.10.0
libtpu: 0.0.40
codegen_flags: <defaults>
</compile_context>

<pallas_src>
import jax
import jax.numpy as jnp
import numpy as np
from jax.experimental import pallas as pl
from jax.experimental.pallas import tpu as pltpu


def softattention_kernel(tgt_ref, ctx_ref, w_ref, out_ref):
    tgt = tgt_ref[...]                                   # (TB, D)    f32
    ctx = ctx_ref[...]                                   # (TB, S, D) f32

    # scores[b, s] = <ctx[b, s, :], tgt[b, :]>
    # VPU broadcast-multiply across the batch tile + lane reduce over D.
    scores = jnp.sum(ctx * tgt[:, None, :], axis=-1, keepdims=True)   # (TB, S, 1)

    # PyTorch padding mask: positions whose dot product is exactly zero get
    # -1e9 (equivalent to scores + ((scores != 0) - 1) * 1e9 since the masked
    # scores are themselves zero).
    scores = jnp.where(scores == 0.0, -1.0e9, scores)

    # Softmax over S; normalisation folded in after the value reduction.
    m = jnp.max(scores, axis=1, keepdims=True)           # (TB, 1, 1)
    e = jnp.exp(scores - m)                              # (TB, S, 1)
    l = jnp.sum(e, axis=1, keepdims=True)                # (TB, 1, 1)

    # context_combined[b, :] = sum_s p[b, s] * ctx[b, s, :]
    # broadcast e over D, multiply, sublane reduce over S.
    cc = jnp.sum(ctx * e, axis=1)                        # (TB, D)
    cc = cc / l[:, 0, :]                                 # exact divide, (TB, D)

    # output = tanh(cat(cc, tgt) @ W^T) — one fused (TB,2D)@(2D,D) MXU matmul.
    cat = jnp.concatenate([cc, tgt], axis=-1)            # (TB, 2D) lane concat
    out = jnp.dot(cat, w_ref[...], preferred_element_type=jnp.float32)
    out_ref[...] = jnp.tanh(out).astype(out_ref.dtype)


def _vmem_budgets():
    """Generation-aware (block budget, vmem limit) in bytes."""
    try:
        cap = int(pltpu.get_tpu_info().vmem_capacity_bytes)
    except Exception:  # be conservative if the query is unavailable
        cap = 64 << 20
    if cap >= (96 << 20):          # v5e / v6e: 128 MiB physical VMEM
        return 88 << 20, 104 << 20
    return 24 << 20, 48 << 20      # v7x: 64 MiB physical VMEM per TensorCore


def _pick_batch_tile(batch, seq, dim, block_budget, min_steps=4):
    """Largest batch tile fitting the VMEM budget, keeping the grid pipelined.

    Accounts for the double-buffered input/output blocks, the resident weight
    block and the (TB,S,D) broadcast-multiply temporaries.  Returns either the
    full batch or a multiple of 8 (sublane granularity); the grid uses cdiv so
    the last block may be ragged.
    """
    per_row = (2 * 4 * (seq * dim + 2 * dim)          # ctx/tgt/out blocks, x2 buffers
               + 4 * (2 * seq * dim + 2 * seq + 4 * dim))  # in-kernel temporaries
    weight_bytes = 2 * (2 * dim) * dim * 4            # resident W^T block, x2 buffers
    rows = max(1, (block_budget - weight_bytes) // per_row)

    tb = min(batch, rows)
    # Keep >= min_steps grid steps when the batch is large enough for
    # sublane-aligned tiles (preserves double-buffering / megacore sharding).
    if batch >= 8 * min_steps:
        tb = min(tb, pl.cdiv(batch, min_steps))
    if tb < batch:
        tb = max(8, (tb // 8) * 8)
        tb = min(tb, batch)
    return tb


def softattention_forward(target_t, context, weight, *, batch_tile=None):
    """weight: (D, 2D) as in torch nn.Linear(2*D, D, bias=False)."""
    B, D = target_t.shape
    Bc, S, Dc = context.shape
    assert (Bc, Dc) == (B, D) and weight.shape == (D, 2 * D)

    block_budget, vmem_limit = _vmem_budgets()
    tb = batch_tile if batch_tile is not None else _pick_batch_tile(
        B, S, D, block_budget)
    tb = min(tb, B)
    grid = (pl.cdiv(B, tb),)                    # ragged last block allowed

    w_t = weight.T                              # (2D, D): cat(cc, tgt) @ W^T

    return pl.pallas_call(
        softattention_kernel,
        out_shape=jax.ShapeDtypeStruct((B, D), jnp.float32),
        grid=grid,
        in_specs=[
            pl.BlockSpec((tb, D), lambda i: (i, 0)),        # target tile
            pl.BlockSpec((tb, S, D), lambda i: (i, 0, 0)),  # context tile (pipelined)
            pl.BlockSpec((2 * D, D), lambda i: (0, 0)),     # W^T (resident)
        ],
        out_specs=pl.BlockSpec((tb, D), lambda i: (i, 0)),
        compiler_params=pltpu.CompilerParams(
            dimension_semantics=("parallel",),   # v7x: shard batch tiles over both TCs
            vmem_limit_bytes=int(vmem_limit),
        ),
    )(target_t, context, w_t)


def _reference(target_t, context, weight):
    scores = jnp.einsum("bsd,bd->bs", context, target_t)
    mask = ((scores != 0).astype(jnp.float32) - 1.0) * 1.0e9
    p = jax.nn.softmax(scores + mask, axis=1)
    cc = jnp.einsum("bs,bsd->bd", p, context)
    return jnp.tanh(jnp.concatenate([cc, target_t], axis=-1) @ weight.T)


if __name__ == "__main__":
    B, S, D = 2, 8, 32  # batch, sequence length, params.dimension

    key = jax.random.PRNGKey(0)
    k1, k2, k3, k4, k5 = jax.random.split(key, 5)

    target_t = jax.random.normal(k1, (B, D), dtype=jnp.float32)
    context = jax.random.normal(k2, (B, S, D), dtype=jnp.float32)
    # zero-pad the last timesteps of one batch so the (atten != 0) padding-mask
    # path is exercised (mirrors padded sequences in the original usage)
    context = context.at[1, S - 3:, :].set(0.0)

    # deterministic synthetic init for nn.Linear(2*D, D, bias=False)
    bound = 1.0 / float(np.sqrt(2.0 * D))
    weight = jax.random.uniform(k3, (D, 2 * D), jnp.float32, -bound, bound)

    out = jax.block_until_ready(softattention_forward(target_t, context, weight))
    np.testing.assert_allclose(np.asarray(out),
                               np.asarray(_reference(target_t, context, weight)),
                               rtol=1e-5, atol=1e-5)

    # Second check: larger batch with an explicit batch tile so the multi-step,
    # double-buffered grid path AND a ragged last block (grid=(3,), tiles 8/8/4)
    # are exercised.
    B2 = 20
    target2 = jax.random.normal(k4, (B2, D), dtype=jnp.float32)
    context2 = jax.random.normal(k5, (B2, S, D), dtype=jnp.float32)
    context2 = context2.at[0, S - 2:, :].set(0.0)

    out2 = jax.block_until_ready(
        softattention_forward(target2, context2, weight, batch_tile=8))
    np.testing.assert_allclose(np.asarray(out2),
                               np.asarray(_reference(target2, context2, weight)),
                               rtol=1e-5, atol=1e-5)

    print("KERNEL_OK")
</pallas_src>

<mosaic_0001>
module attributes {stable_mosaic.version = 11 : i64} {
  func.func @softattention_kernel(%arg0: i32, %arg1: memref<2x32xf32, #tpu.memory_space<vmem>>, %arg2: memref<2x8x32xf32, #tpu.memory_space<vmem>>, %arg3: memref<64x32xf32, #tpu.memory_space<vmem>>, %arg4: memref<2x32xf32, #tpu.memory_space<vmem>>) attributes {dimension_semantics = [#tpu.dimension_semantics<parallel>], iteration_bounds = array<i64: 1>, scalar_prefetch = 0 : i64, scratch_operands = 0 : i64, tpu.core_type = #tpu.core_type<tc>, window_params = [{transform_indices = @transform_0, window_bounds = array<i64: 2, 32>}, {transform_indices = @transform_1, window_bounds = array<i64: 2, 8, 32>}, {pipeline_mode = #tpu.pipeline_mode<synchronous>, transform_indices = @transform_2, window_bounds = array<i64: 64, 32>}, {transform_indices = @transform_3, window_bounds = array<i64: 2, 32>}]} {
    %c0 = arith.constant 0 : index
    %c0_0 = arith.constant 0 : index
    %0 = vector.load %arg1[%c0, %c0_0] : memref<2x32xf32, #tpu.memory_space<vmem>>, vector<2x32xf32>
    %c0_1 = arith.constant 0 : index
    %c0_2 = arith.constant 0 : index
    %c0_3 = arith.constant 0 : index
    %1 = vector.load %arg2[%c0_1, %c0_2, %c0_3] : memref<2x8x32xf32, #tpu.memory_space<vmem>>, vector<2x8x32xf32>
    %2 = vector.shape_cast %0 : vector<2x32xf32> to vector<2x1x32xf32>
    %3 = vector.broadcast %2 : vector<2x1x32xf32> to vector<2x8x32xf32>
    %4 = arith.mulf %1, %3 : vector<2x8x32xf32>
    %cst = arith.constant dense<0.000000e+00> : vector<2x8xf32>
    %5 = vector.multi_reduction <add>, %4, %cst [2] : vector<2x8x32xf32> to vector<2x8xf32>
    %6 = vector.shape_cast %5 : vector<2x8xf32> to vector<2x8x1xf32>
    %cst_4 = arith.constant 0.000000e+00 : f32
    %7 = vector.broadcast %cst_4 : f32 to vector<2x8x1xf32>
    %8 = arith.cmpf oeq, %6, %7 : vector<2x8x1xf32>
    %cst_5 = arith.constant -1.000000e+09 : f32
    %9 = vector.broadcast %cst_5 : f32 to vector<2x8x1xf32>
    %10 = arith.select %8, %9, %6 : vector<2x8x1xi1>, vector<2x8x1xf32>
    %cst_6 = arith.constant dense<0xFF800000> : vector<2x1xf32>
    %11 = vector.multi_reduction <maximumf>, %10, %cst_6 [1] : vector<2x8x1xf32> to vector<2x1xf32>
    %12 = vector.shape_cast %11 : vector<2x1xf32> to vector<2x1x1xf32>
    %13 = vector.broadcast %12 : vector<2x1x1xf32> to vector<2x8x1xf32>
    %14 = arith.subf %10, %13 : vector<2x8x1xf32>
    %15 = math.exp %14 : vector<2x8x1xf32>
    %cst_7 = arith.constant dense<0.000000e+00> : vector<2x1xf32>
    %16 = vector.multi_reduction <add>, %15, %cst_7 [1] : vector<2x8x1xf32> to vector<2x1xf32>
    %17 = vector.shape_cast %16 : vector<2x1xf32> to vector<2x1x1xf32>
    %18 = vector.broadcast %15 : vector<2x8x1xf32> to vector<2x8x32xf32>
    %19 = arith.mulf %1, %18 : vector<2x8x32xf32>
    %cst_8 = arith.constant dense<0.000000e+00> : vector<2x32xf32>
    %20 = vector.multi_reduction <add>, %19, %cst_8 [1] : vector<2x8x32xf32> to vector<2x32xf32>
    %21 = vector.shape_cast %17 : vector<2x1x1xf32> to vector<2x1xf32>
    %22 = vector.broadcast %21 : vector<2x1xf32> to vector<2x32xf32>
    %23 = arith.divf %20, %22 : vector<2x32xf32>
    %24 = tpu.concatenate %23, %0 in 1 : vector<2x32xf32>, vector<2x32xf32> -> vector<2x64xf32>
    %c0_9 = arith.constant 0 : index
    %c0_10 = arith.constant 0 : index
    %25 = vector.load %arg3[%c0_9, %c0_10] : memref<64x32xf32, #tpu.memory_space<vmem>>, vector<64x32xf32>
    %cst_11 = arith.constant dense<0.000000e+00> : vector<2x32xf32>
    %26 = tpu.matmul %24, %25, %cst_11 {dimension_numbers = #tpu.dot_dimension_numbers<[1], [0], [0], [1], [0, 0, 1, 1], [], []>} : vector<2x64xf32>, vector<64x32xf32>, vector<2x32xf32> -> vector<2x32xf32>
    %27 = math.tanh %26 : vector<2x32xf32>
    %c0_12 = arith.constant 0 : index
    %c0_13 = arith.constant 0 : index
    %28 = vector.load %arg4[%c0_12, %c0_13] : memref<2x32xf32, #tpu.memory_space<vmem>>, vector<2x32xf32>
    tpu.vector_store %arg4[%c0_12, %c0_13], %27 {strides = array<i32>} : memref<2x32xf32, #tpu.memory_space<vmem>>, vector<2x32xf32>,
    return
  }
  func.func @transform_0(%arg0: i32) -> (i32, i32) {
    %c0_i32 = arith.constant 0 : i32
    %c0_i32_0 = arith.constant 0 : i32
    return %arg0, %c0_i32 : i32, i32
  }
  func.func @transform_1(%arg0: i32) -> (i32, i32, i32) {
    %c0_i32 = arith.constant 0 : i32
    %c0_i32_0 = arith.constant 0 : i32
    %c0_i32_1 = arith.constant 0 : i32
    return %arg0, %c0_i32, %c0_i32_0 : i32, i32, i32
  }
  func.func @transform_2(%arg0: i32) -> (i32, i32) {
    %c0_i32 = arith.constant 0 : i32
    %c0_i32_0 = arith.constant 0 : i32
    %c0_i32_1 = arith.constant 0 : i32
    return %c0_i32, %c0_i32_0 : i32, i32
  }
  func.func @transform_3(%arg0: i32) -> (i32, i32) {
    %c0_i32 = arith.constant 0 : i32
    %c0_i32_0 = arith.constant 0 : i32
    return %arg0, %c0_i32 : i32, i32
  }
}

</mosaic_0001>

<llo_original>
// kernel: tpu_custom_call.1
$region0: #{tpu_custom_call.1}
  #allocation0 [shape = 'u32[]', space=smem, size = 0x4, offset = 0x4, fixed_abs, tag = 'smem constant byte address 0x4 - core index']
  #allocation1 [shape = 'u32[144,128]{1,0:T(1,128)}', space=vmem, size = 0x12000, scoped, tag = 'internal scratch']
  %s0 = inlined_call_operand.vmem [shape: f32[2,32], index: 0, kind: input, shape index: {}]
  %s1 = inlined_call_operand.vmem [shape: f32[2,8,32], index: 1, kind: input, shape index: {}]
  %s2 = inlined_call_operand.vmem [shape: f32[64,32], index: 2, kind: input, shape index: {}]
  %s3 = inlined_call_operand.hbm [shape: f32[2,32], index: 3, kind: output, shape index: {}]
  %s4 = sld [smem:[#allocation0]]
  $region22: #{tpu_custom_call.1} parent=0
    _
  %s6 = ssub.s32 1, %s4
  %s7 = scalar_select 0, %s6, %s4
  $region1: #{tpu_custom_call.1} parent=0
    #allocation2 [shape = 'u8[1024]{0}', space=vmem, size = 0x400, scoped, tag = 'output window, operand 0, single buffered']
    #allocation3 [shape = 's32[1]{0}', space=sflag, size = 0x4, scoped, tag = 'scoped memory for tpu_custom_call.1']
    %8 = vsyncpa [#allocation3], 0
    // Predicated region
    $region2: #{tpu_custom_call.1} parent=1 // pred_check
      _
    $region3: #{tpu_custom_call.1} parent=1 // pred_check_branch
      %10 = sbr.rel (0) target = $region5
    $region4: #{tpu_custom_call.1} parent=1 // pred_region
      _
    $region5: #{tpu_custom_call.1} parent=1 // pred_fallthru
      _
    // Predicated region
    $region6: #{tpu_custom_call.1} parent=1 // pred_check
      _
    $region7: #{tpu_custom_call.1} parent=1 // pred_check_branch
      %12 = sbr.rel (0) target = $region9
    $region8: #{tpu_custom_call.1} parent=1 // pred_region
      _
    $region9: #{tpu_custom_call.1} parent=1 // pred_fallthru
      _
    // Predicated region
    $region10: #{tpu_custom_call.1} parent=1 // pred_check
      _
    $region11: #{tpu_custom_call.1} parent=1 // pred_check_branch
      %14 = sbr.rel (0) target = $region13
    $region12: #{tpu_custom_call.1} parent=1 // pred_region
      _
    $region13: #{tpu_custom_call.1} parent=1 // pred_fallthru
      _
    %v15 = vld [vmem:[%s0] sm:$0x3]
    %v16 = vld [vmem:[%s1] sm:$0xff]
    %v17 = vld [vmem:[%s1 + $0x8] sm:$0xff]
    %v20 = vunpack.c.l.s4 1966171168
    %v21 = vunpack.c.0.s8 %v20
    %v22 = vlaneseq
    %v23 = vshrl.u32 %v22, 7
    %v24 = vsub.s32 %v21, %v23
    %v25 = vrot.slane %v15, %v24
    %v26 = vcombine.high %v25, %v25
    %v28 = vunpack.c.l.s4 1966171168
    %v29 = vunpack.c.0.s8 %v28
    %v30 = vlaneseq
    %v31 = vshrl.u32 %v30, 7
    %v32 = vsub.s32 %v29, %v31
    %v33 = vrot.slane %v25, %v32
    %v35 = vunpack.c.l.s4 1966171168
    %v36 = vunpack.c.0.s8 %v35
    %v37 = vlaneseq
    %v38 = vshrl.u32 %v37, 7
    %v39 = vsub.s32 %v36, %v38
    %v40 = vrot.slane %v26, %v39
    %v41 = vlaneseq
    %v42 = vshrl.u32 %v41, 7
    %v43 = vsub.s32 0, %v42
    %v44 = vrot.slane %v33, %v43
    %v45 = vlaneseq
    %v46 = vshrl.u32 %v45, 7
    %v47 = vsub.s32 0, %v46
    %v48 = vrot.slane %v40, %v47
    %v51 = vmul.f32 %v16, %v44
    %v52 = vmul.f32 %v17, %v48
    %vm53 = vcmask 261120
    %v54 = vsel %vm53, %v51, 0.0
    %55 = vadd.xlane.f32.xlu0 %v54
    %v56 = vpop.xlane.xlu0 %55
    %v57 = vsel %vm53, %v52, 0.0
    %58 = vadd.xlane.f32.xlu0 %v57
    %v59 = vpop.xlane.xlu0 %58
    %vm60 = vcmp.eq.f32.partialorder %v56, 0.0
    %vm61 = vcmp.eq.f32.partialorder %v59, 0.0
    %v62 = vsel %vm60, -1e+09, %v56
    %v63 = vsel %vm61, -1e+09, %v59
    %v64 = vrot.slane %v62, 4
    %v65 = vmax.f32 %v62, %v64
    %v66 = vrot.slane %v65, 2
    %v67 = vmax.f32 %v65, %v66
    %v68 = vrot.slane %v67, 1
    %v69 = vmax.f32 %v67, %v68
    %v70 = vrot.slane %v63, 4
    %v71 = vmax.f32 %v63, %v70
    %v72 = vrot.slane %v71, 2
    %v73 = vmax.f32 %v71, %v72
    %v74 = vrot.slane %v73, 1
    %v75 = vmax.f32 %v73, %v74
    %v76 = vsub.f32 %v62, %v69
    %v77 = vsub.f32 %v63, %v75
    %v78 = vmul.f32 %v76, 1.442695
    %v79 = vpow.pop %v78
    %v80 = vmul.f32 %v77, 1.442695
    %v81 = vpow.pop %v80
    %v82 = vrot.slane %v79, 4
    %v83 = vadd.f32 %v79, %v82
    %v84 = vrot.slane %v83, 2
    %v85 = vadd.f32 %v83, %v84
    %v86 = vrot.slane %v85, 1
    %v87 = vadd.f32 %v85, %v86
    %v88 = vrot.slane %v81, 4
    %v89 = vadd.f32 %v81, %v88
    %v90 = vrot.slane %v89, 2
    %v91 = vadd.f32 %v89, %v90
    %v92 = vrot.slane %v91, 1
    %v93 = vadd.f32 %v91, %v92
    %v94 = vmul.f32 %v16, %v79
    %v95 = vmul.f32 %v17, %v81
    %v96 = vsel %vm53, %v94, 0.0
    %v97 = vrot.slane %v96, 4
    %v98 = vadd.f32 %v96, %v97
    %v99 = vrot.slane %v98, 2
    %v100 = vadd.f32 %v98, %v99
    %v101 = vrot.slane %v100, 1
    %v102 = vadd.f32 %v100, %v101
    %v103 = vsel %vm53, %v95, 0.0
    %v104 = vrot.slane %v103, 4
    %v105 = vadd.f32 %v103, %v104
    %v106 = vrot.slane %v105, 2
    %v107 = vadd.f32 %v105, %v106
    %v108 = vrot.slane %v107, 1
    %v109 = vadd.f32 %v107, %v108
    %v110 = vrcp.pop %v87
    %v111 = vmul.f32 %v102, %v110
    %v112 = vrcp.pop %v93
    %v113 = vmul.f32 %v109, %v112
    %vm116 = vcmask 1041409
    %v117 = vsel %vm116, %v113, %v111
    %119 = vrot.lane.b32.xlu0 %v15, 32
    %v120 = vpop.permute.xlu0 %119
    %v122 = vsel %vm53, %v117, %v120
    %v123 = vld [vmem:[%s2] sm:$0xff]
    %v124 = vld [vmem:[%s2 + $0x8] sm:$0xff]
    %v125 = vld [vmem:[%s2 + $0x10] sm:$0xff]
    %v126 = vld [vmem:[%s2 + $0x18] sm:$0xff]
    %v127 = vld [vmem:[%s2 + $0x20] sm:$0xff]
    %v128 = vld [vmem:[%s2 + $0x28] sm:$0xff]
    %v129 = vld [vmem:[%s2 + $0x30] sm:$0xff]
    %v130 = vld [vmem:[%s2 + $0x38] sm:$0xff]
    %vm131 = vcmask 523264
    %v133 = vsel %vm131, %v122, 0
    %135 = vmatprep.subr.mxu0 0.0
    %136 = vmatpush1.msra.mxu0 %v123
    %137 = vmatprep.subr.mxu0 0.0
    %138 = vmatpush1.msra.mxu0 %v124
    %139 = vmatprep.subr.mxu0 0.0
    %140 = vmatpush1.msra.mxu0 %v125
    %141 = vmatprep.subr.mxu0 0.0
    %142 = vmatpush1.msra.mxu0 %v126
    %143 = vmatprep.subr.mxu0 0.0
    %144 = vmatpush1.msra.mxu0 %v127
    %145 = vmatprep.subr.mxu0 0.0
    %146 = vmatpush1.msra.mxu0 %v128
    %147 = vmatprep.subr.mxu0 0.0
    %148 = vmatpush1.msra.mxu0 %v129
    %149 = vmatprep.subr.mxu0 0.0
    %150 = vmatpush1.msra.mxu0 %v130
    %151 = vmatprep.subr.mxu0 0.0
    %152 = vmatpush1.msra.mxu0 0.0
    %153 = vmatprep.subr.mxu0 0.0
    %154 = vmatpush1.msra.mxu0 0.0
    %155 = vmatprep.subr.mxu0 0.0
    %156 = vmatpush1.msra.mxu0 0.0
    %157 = vmatprep.subr.mxu0 0.0
    %158 = vmatpush1.msra.mxu0 0.0
    %159 = vmatprep.subr.mxu0 0.0
    %160 = vmatpush1.msra.mxu0 0.0
    %161 = vmatprep.subr.mxu0 0.0
    %162 = vmatpush1.msra.mxu0 0.0
    %163 = vmatprep.subr.mxu0 0.0
    %164 = vmatpush1.msra.mxu0 0.0
    %165 = vmatprep.subr.mxu0 0.0
    %166 = vmatpush1.msra.mxu0 0.0
    %167 = vmatprep.subr.mxu0 0.0
    %168 = vmatpush1.msra.mxu0 0.0
    %169 = vmatprep.subr.mxu0 0.0
    %170 = vmatpush1.msra.mxu0 0.0
    %171 = vmatprep.subr.mxu0 0.0
    %172 = vmatpush1.msra.mxu0 0.0
    %173 = vmatprep.subr.mxu0 0.0
    %174 = vmatpush1.msra.mxu0 0.0
    %175 = vmatprep.subr.mxu0 0.0
    %176 = vmatpush1.msra.mxu0 0.0
    %177 = vmatprep.subr.mxu0 0.0
    %178 = vmatpush1.msra.mxu0 0.0
    %179 = vmatprep.subr.mxu0 0.0
    %180 = vmatpush1.msra.mxu0 0.0
    %181 = vmatprep.subr.mxu0 0.0
    %182 = vmatpush1.msra.mxu0 0.0
    %183 = vmatprep.subr.mxu0 0.0
    %184 = vmatpush1.msra.mxu0 0.0
    %185 = vmatprep.subr.mxu0 0.0
    %186 = vmatpush1.msra.mxu0 0.0
    %187 = vmatprep.subr.mxu0 0.0
    %188 = vmatpush1.msra.mxu0 0.0
    %189 = vmatprep.subr.mxu0 0.0
    %190 = vmatpush1.msra.mxu0 0.0
    %191 = vmatprep.subr.mxu0 0.0
    %192 = vmatpush1.msra.mxu0 0.0
    %193 = vmatprep.subr.mxu0 0.0
    %194 = vmatpush1.msra.mxu0 0.0
    %195 = vmatprep.subr.mxu0 0.0
    %196 = vmatpush1.msra.mxu0 0.0
    %197 = vmatprep.subr.mxu0 0.0
    %198 = vmatpush1.msra.mxu0 0.0
    %199 = vmatprep.mubr.f32.mxu0 0.0
    %200 = vmatmul.mubr.f32.gmra.mrb[0].mxu0 %v133
    %v201 = vpop.f32.mrb[0].mxu0
    %v202 = vadd.f32 0.0, %v201
    %v203 = vpop.f32.mrb[0].mxu0
    %204 = vdwg.mxu0
    %v205 = vtanh.pop %v202
    %vm206 = vcmask 254976
    %207 = vst.msk [vmem:[#allocation2] sm:$0x3] %vm206, %v205
    // Predicated region
    $region14: #{tpu_custom_call.1} parent=1 // pred_check
      _
    $region15: #{tpu_custom_call.1} parent=1 // pred_check_branch
      %209 = sbr.rel (0) target = $region17
    $region16: #{tpu_custom_call.1} parent=1 // pred_region
      %s211 = ssub.s32 32, 32
      %212 = vsyncadd [#allocation3], %s211
      %s214 = sshll.u32 [#allocation2], 4
      %s215 = int_to_ptr.vmem [resolvable:$true] %s214
      %217 = dma.vmem_to_hbm [thread:$0]  %s215, 32, %s3, [#allocation3]
    $region17: #{tpu_custom_call.1} parent=1 // pred_fallthru
      _
    // Predicated region
    $region18: #{tpu_custom_call.1} parent=1 // pred_check
      _
    $region19: #{tpu_custom_call.1} parent=1 // pred_check_branch
      %219 = sbr.rel (0) target = $region21
    $region20: #{tpu_custom_call.1} parent=1 // pred_region
      %220 = dma.done [#allocation3], 32
    $region21: #{tpu_custom_call.1} parent=1 // pred_fallthru
      _
    %221 = vsyncpa [#allocation3], 1

</llo_original>
